<compile_context>
chip_gen: v6e
topology: v6e:2x2x1
jax: 0.10.0
libtpu: 0.0.40
codegen_flags: <defaults>
</compile_context>

<pallas_src>
import math

import jax
import jax.numpy as jnp
from jax.experimental import pallas as pl
from jax.experimental.pallas import tpu as pltpu


def _round_up(n, m):
    return ((n + m - 1) // m) * m


def _choose_batch_tile(B, batch_tile=2048):
    """128-aligned batch tile.

    Capped at 2048 rows (~6 MiB of VMEM buffers + temporaries with bf16
    inputs), which fits v5e's 16 MiB scoped-VMEM default and v7x's 64 MiB
    physical VMEM.  When the (128-padded) batch fits in fewer than two max
    tiles, split it roughly in half so the "parallel" batch axis has >= 2
    grid steps and both v7x TensorCores get work.
    """
    cap = max(128, (min(int(batch_tile), 2048) // 128) * 128)
    B128 = _round_up(B, 128)
    if B128 <= 128:
        return 128
    n_blocks = B128 // 128
    half = (-(-n_blocks // 2)) * 128          # ceil(n_blocks / 2) * 128
    return min(half, cap)


def _soft_q_kernel(x_ref, a_ref, w1_ref, b1_ref, w2_ref, b2_ref,
                   w3_ref, b3_ref, out_ref):
    # fc1 + ReLU: concat x/a on the lane axis in-kernel (one cheap lane shift)
    # so the small-K fc1 issues ONE set of MXU pushes instead of two.
    xa = jnp.concatenate([x_ref[...], a_ref[...]], axis=-1)       # (TB, d_in) bf16
    h1 = jnp.dot(xa, w1_ref[...],
                 preferred_element_type=jnp.float32) + b1_ref[...]
    h1 = jnp.maximum(h1, 0.0)

    # fc2 + ReLU (bf16 MXU, f32 accumulate)
    h2 = jnp.dot(h1.astype(jnp.bfloat16), w2_ref[...],
                 preferred_element_type=jnp.float32) + b2_ref[...]
    h2 = jnp.maximum(h2, 0.0)

    # fc3 (out_features == 1): (1,128) contracted against (TB,128) on the MXU
    # -> (1, TB) produced lane-dense directly (no sublane->lane relayout).
    q = jax.lax.dot_general(w3_ref[...], h2.astype(jnp.bfloat16),
                            dimension_numbers=(((1,), (1,)), ((), ())),
                            preferred_element_type=jnp.float32)   # (1, TB)
    out_ref[...] = q + b3_ref[0]                                  # scalar bias (SMEM)


def soft_q_forward(x, a, params, *, batch_tile=2048):
    """x: [B, input_shape], a: [B, output_shape] -> q: [B, 1] (float32)."""
    B, d_x = x.shape
    _, d_a = a.shape

    # bf16 inputs: the only per-row HBM read halves; matmuls accumulate f32.
    x = x.astype(jnp.bfloat16)
    a = a.astype(jnp.bfloat16)

    TB = _choose_batch_tile(B, batch_tile)
    B_pad = _round_up(B, TB)
    if B_pad != B:
        x = jnp.pad(x, ((0, B_pad - B), (0, 0)))
        a = jnp.pad(a, ((0, B_pad - B), (0, 0)))
    num_tiles = B_pad // TB

    w1, b1 = params["w1"], params["b1"]
    w2, b2 = params["w2"], params["b2"]
    w3, b3 = params["w3"], params["b3"]

    def const_spec(arr):
        # Weights / biases: same block every grid step -> stay VMEM-resident.
        return pl.BlockSpec(arr.shape, lambda i: (0,) * arr.ndim)

    q_row = pl.pallas_call(
        _soft_q_kernel,
        out_shape=jax.ShapeDtypeStruct((1, B_pad), jnp.float32),
        grid=(num_tiles,),
        in_specs=[
            pl.BlockSpec((TB, d_x), lambda i: (i, 0)),            # x batch tile
            pl.BlockSpec((TB, d_a), lambda i: (i, 0)),            # a batch tile
            const_spec(w1), const_spec(b1),
            const_spec(w2), const_spec(b2),
            const_spec(w3),
            pl.BlockSpec(memory_space=pltpu.MemorySpace.SMEM),    # b3 scalar
        ],
        out_specs=pl.BlockSpec((1, TB), lambda i: (0, i)),        # lane-dense q
        compiler_params=pltpu.CompilerParams(
            dimension_semantics=("parallel",)),
    )(x, a, w1, b1, w2, b2, w3, b3)

    return q_row[0, :B].reshape(B, 1)


def init_params(key, input_shape, output_shape):
    """Xavier-uniform weights (gain=1), zero biases, matching
    layer_init(weights_init='xavier', bias_init='zeros')."""
    def xavier(k, fan_in, fan_out):
        bound = math.sqrt(6.0 / (fan_in + fan_out))
        return jax.random.uniform(k, (fan_in, fan_out), jnp.float32,
                                  minval=-bound, maxval=bound)

    k1, k2, k3 = jax.random.split(key, 3)
    d_in = input_shape + output_shape
    return {
        "w1": xavier(k1, d_in, 256).astype(jnp.bfloat16),      # stacked [Wx; Wa]
        "b1": jnp.zeros((1, 256), jnp.float32),
        "w2": xavier(k2, 256, 128).astype(jnp.bfloat16),
        "b2": jnp.zeros((1, 128), jnp.float32),
        # fc3 weight stored row-shaped (1, 128) = nn.Linear(128, 1).weight.
        "w3": xavier(k3, 128, 1).reshape(1, 128).astype(jnp.bfloat16),
        "b3": jnp.zeros((1,), jnp.float32),
    }


if __name__ == "__main__":
    key = jax.random.PRNGKey(0)
    k_obs, k_act, k_par = jax.random.split(key, 3)

    batch = 2
    input_shape = 8    # env.observation_space.shape[0]
    output_shape = 4   # env.action_space.shape[0]

    x = jax.random.normal(k_obs, (batch, input_shape), jnp.float32)
    a = jax.random.normal(k_act, (batch, output_shape), jnp.float32)
    params = init_params(k_par, input_shape, output_shape)

    q = soft_q_forward(x, a, params)
    q = jax.block_until_ready(q)
    assert q.shape == (batch, 1)

    # Reference in plain JAX with the SAME precision policy the kernel uses
    # (bf16 inputs/weights on the matmuls, f32 accumulation / elementwise).
    xa = jnp.concatenate([x.astype(jnp.bfloat16), a.astype(jnp.bfloat16)], axis=1)
    h1 = jnp.maximum(
        jnp.dot(xa, params["w1"], preferred_element_type=jnp.float32)
        + params["b1"], 0.0)
    h2 = jnp.maximum(
        jnp.dot(h1.astype(jnp.bfloat16), params["w2"],
                preferred_element_type=jnp.float32) + params["b2"], 0.0)
    q_ref = (jnp.dot(h2.astype(jnp.bfloat16), params["w3"].T,
                     preferred_element_type=jnp.float32) + params["b3"][0])

    # bf16-matmul policy: expect ~1e-2-level agreement with any f32 reference;
    # against the same-policy reference this is comfortably tight.
    assert jnp.allclose(q, q_ref, atol=1e-2, rtol=1e-2), (q, q_ref)
    print("KERNEL_OK")
</pallas_src>

<mosaic_0001>
module attributes {stable_mosaic.version = 11 : i64} {
  func.func @_soft_q_kernel(%arg0: i32, %arg1: memref<128x8xbf16, #tpu.memory_space<vmem>>, %arg2: memref<128x4xbf16, #tpu.memory_space<vmem>>, %arg3: memref<12x256xbf16, #tpu.memory_space<vmem>>, %arg4: memref<1x256xf32, #tpu.memory_space<vmem>>, %arg5: memref<256x128xbf16, #tpu.memory_space<vmem>>, %arg6: memref<1x128xf32, #tpu.memory_space<vmem>>, %arg7: memref<1x128xbf16, #tpu.memory_space<vmem>>, %arg8: memref<1xf32, #tpu.memory_space<smem>>, %arg9: memref<1x128xf32, #tpu.memory_space<vmem>>) attributes {dimension_semantics = [#tpu.dimension_semantics<parallel>], iteration_bounds = array<i64: 1>, scalar_prefetch = 0 : i64, scratch_operands = 0 : i64, tpu.core_type = #tpu.core_type<tc>, window_params = [{transform_indices = @transform_0, window_bounds = array<i64: 128, 8>}, {transform_indices = @transform_1, window_bounds = array<i64: 128, 4>}, {pipeline_mode = #tpu.pipeline_mode<synchronous>, transform_indices = @transform_2, window_bounds = array<i64: 12, 256>}, {pipeline_mode = #tpu.pipeline_mode<synchronous>, transform_indices = @transform_3, window_bounds = array<i64: 1, 256>}, {pipeline_mode = #tpu.pipeline_mode<synchronous>, transform_indices = @transform_4, window_bounds = array<i64: 256, 128>}, {pipeline_mode = #tpu.pipeline_mode<synchronous>, transform_indices = @transform_5, window_bounds = array<i64: 1, 128>}, {pipeline_mode = #tpu.pipeline_mode<synchronous>, transform_indices = @transform_6, window_bounds = array<i64: 1, 128>}, {transform_indices = @transform_7, window_bounds = array<i64: 1>}, {transform_indices = @transform_8, window_bounds = array<i64: 1, 128>}]} {
    %c0 = arith.constant 0 : index
    %c0_0 = arith.constant 0 : index
    %0 = vector.load %arg1[%c0, %c0_0] : memref<128x8xbf16, #tpu.memory_space<vmem>>, vector<128x8xbf16>
    %c0_1 = arith.constant 0 : index
    %c0_2 = arith.constant 0 : index
    %1 = vector.load %arg2[%c0_1, %c0_2] : memref<128x4xbf16, #tpu.memory_space<vmem>>, vector<128x4xbf16>
    %2 = tpu.concatenate %0, %1 in 1 : vector<128x8xbf16>, vector<128x4xbf16> -> vector<128x12xbf16>
    %c0_3 = arith.constant 0 : index
    %c0_4 = arith.constant 0 : index
    %3 = vector.load %arg3[%c0_3, %c0_4] : memref<12x256xbf16, #tpu.memory_space<vmem>>, vector<12x256xbf16>
    %cst = arith.constant dense<0.000000e+00> : vector<128x256xf32>
    %4 = tpu.matmul %2, %3, %cst {dimension_numbers = #tpu.dot_dimension_numbers<[1], [0], [0], [1], [0, 0, 1, 1], [], []>} : vector<128x12xbf16>, vector<12x256xbf16>, vector<128x256xf32> -> vector<128x256xf32>
    %c0_5 = arith.constant 0 : index
    %c0_6 = arith.constant 0 : index
    %5 = vector.load %arg4[%c0_5, %c0_6] : memref<1x256xf32, #tpu.memory_space<vmem>>, vector<1x256xf32>
    %6 = vector.broadcast %5 : vector<1x256xf32> to vector<128x256xf32>
    %7 = arith.addf %4, %6 : vector<128x256xf32>
    %cst_7 = arith.constant 0.000000e+00 : f32
    %8 = vector.broadcast %cst_7 : f32 to vector<128x256xf32>
    %9 = arith.maximumf %7, %8 : vector<128x256xf32>
    %10 = arith.truncf %9 : vector<128x256xf32> to vector<128x256xbf16>
    %c0_8 = arith.constant 0 : index
    %c0_9 = arith.constant 0 : index
    %11 = vector.load %arg5[%c0_8, %c0_9] : memref<256x128xbf16, #tpu.memory_space<vmem>>, vector<256x128xbf16>
    %cst_10 = arith.constant dense<0.000000e+00> : vector<128x128xf32>
    %12 = tpu.matmul %10, %11, %cst_10 {dimension_numbers = #tpu.dot_dimension_numbers<[1], [0], [0], [1], [0, 0, 1, 1], [], []>} : vector<128x256xbf16>, vector<256x128xbf16>, vector<128x128xf32> -> vector<128x128xf32>
    %c0_11 = arith.constant 0 : index
    %c0_12 = arith.constant 0 : index
    %13 = vector.load %arg6[%c0_11, %c0_12] : memref<1x128xf32, #tpu.memory_space<vmem>>, vector<1x128xf32>
    %14 = vector.broadcast %13 : vector<1x128xf32> to vector<128x128xf32>
    %15 = arith.addf %12, %14 : vector<128x128xf32>
    %cst_13 = arith.constant 0.000000e+00 : f32
    %16 = vector.broadcast %cst_13 : f32 to vector<128x128xf32>
    %17 = arith.maximumf %15, %16 : vector<128x128xf32>
    %c0_14 = arith.constant 0 : index
    %c0_15 = arith.constant 0 : index
    %18 = vector.load %arg7[%c0_14, %c0_15] : memref<1x128xbf16, #tpu.memory_space<vmem>>, vector<1x128xbf16>
    %19 = arith.truncf %17 : vector<128x128xf32> to vector<128x128xbf16>
    %cst_16 = arith.constant dense<0.000000e+00> : vector<1x128xf32>
    %20 = tpu.matmul %18, %19, %cst_16 {dimension_numbers = #tpu.dot_dimension_numbers<[1], [1], [0], [0], [0, 0, 1, 0], [], []>} : vector<1x128xbf16>, vector<128x128xbf16>, vector<1x128xf32> -> vector<1x128xf32>
    %c0_17 = arith.constant 0 : index
    %21 = memref.load %arg8[%c0_17] : memref<1xf32, #tpu.memory_space<smem>>
    %22 = vector.broadcast %21 : f32 to vector<1x128xf32>
    %23 = arith.addf %20, %22 : vector<1x128xf32>
    %c0_18 = arith.constant 0 : index
    %c0_19 = arith.constant 0 : index
    %24 = vector.load %arg9[%c0_18, %c0_19] : memref<1x128xf32, #tpu.memory_space<vmem>>, vector<1x128xf32>
    tpu.vector_store %arg9[%c0_18, %c0_19], %23 {strides = array<i32>} : memref<1x128xf32, #tpu.memory_space<vmem>>, vector<1x128xf32>,
    return
  }
  func.func @transform_0(%arg0: i32) -> (i32, i32) {
    %c0_i32 = arith.constant 0 : i32
    %c0_i32_0 = arith.constant 0 : i32
    return %arg0, %c0_i32 : i32, i32
  }
  func.func @transform_1(%arg0: i32) -> (i32, i32) {
    %c0_i32 = arith.constant 0 : i32
    %c0_i32_0 = arith.constant 0 : i32
    return %arg0, %c0_i32 : i32, i32
  }
  func.func @transform_2(%arg0: i32) -> (i32, i32) {
    %c0_i32 = arith.constant 0 : i32
    %c0_i32_0 = arith.constant 0 : i32
    %c0_i32_1 = arith.constant 0 : i32
    return %c0_i32, %c0_i32_0 : i32, i32
  }
  func.func @transform_3(%arg0: i32) -> (i32, i32) {
    %c0_i32 = arith.constant 0 : i32
    %c0_i32_0 = arith.constant 0 : i32
    %c0_i32_1 = arith.constant 0 : i32
    return %c0_i32, %c0_i32_0 : i32, i32
  }
  func.func @transform_4(%arg0: i32) -> (i32, i32) {
    %c0_i32 = arith.constant 0 : i32
    %c0_i32_0 = arith.constant 0 : i32
    %c0_i32_1 = arith.constant 0 : i32
    return %c0_i32, %c0_i32_0 : i32, i32
  }
  func.func @transform_5(%arg0: i32) -> (i32, i32) {
    %c0_i32 = arith.constant 0 : i32
    %c0_i32_0 = arith.constant 0 : i32
    %c0_i32_1 = arith.constant 0 : i32
    return %c0_i32, %c0_i32_0 : i32, i32
  }
  func.func @transform_6(%arg0: i32) -> (i32, i32) {
    %c0_i32 = arith.constant 0 : i32
    %c0_i32_0 = arith.constant 0 : i32
    %c0_i32_1 = arith.constant 0 : i32
    return %c0_i32, %c0_i32_0 : i32, i32
  }
  func.func @transform_7(%arg0: i32) -> i32 {
    %c0_i32 = arith.constant 0 : i32
    %c0_i32_0 = arith.constant 0 : i32
    return %c0_i32 : i32
  }
  func.func @transform_8(%arg0: i32) -> (i32, i32) {
    %c0_i32 = arith.constant 0 : i32
    %c0_i32_0 = arith.constant 0 : i32
    return %c0_i32, %arg0 : i32, i32
  }
}

</mosaic_0001>

<llo_original>
// kernel: tpu_custom_call.1
$region0: #{tpu_custom_call.1}
  #allocation0 [shape = 'u32[]', space=smem, size = 0x4, offset = 0x4, fixed_abs, tag = 'smem constant byte address 0x4 - core index']
  #allocation1 [shape = 'u32[144,128]{1,0:T(1,128)}', space=vmem, size = 0x12000, scoped, tag = 'internal scratch']
  #allocation2 [shape = 'f32[1]{0:T(128)S(6)}', space=smem, size = 0x200, scoped, tag = 'scoped memory for tpu_custom_call.1']
  %s0 = inlined_call_operand.vmem [shape: bf16[128,8], index: 0, kind: input, shape index: {}]
  %s1 = inlined_call_operand.vmem [shape: bf16[128,4], index: 1, kind: input, shape index: {}]
  %s2 = inlined_call_operand.hbm [shape: bf16[12,256], index: 2, kind: input, shape index: {}]
  %s3 = inlined_call_operand.vmem [shape: f32[1,256], index: 3, kind: input, shape index: {}]
  %s4 = inlined_call_operand.vmem [shape: bf16[256,128], index: 4, kind: input, shape index: {}]
  %s5 = inlined_call_operand.vmem [shape: f32[1,128], index: 5, kind: input, shape index: {}]
  %s6 = inlined_call_operand.vmem [shape: bf16[1,128], index: 6, kind: input, shape index: {}]
  %s7 = inlined_call_operand.<no memory space> [shape: f32[1], index: 7, kind: input, shape index: {}]
  %s8 = inlined_call_operand.hbm [shape: f32[1,128], index: 8, kind: output, shape index: {}]
  %s9 = sld [smem:[#allocation0]]
  $region46: #{tpu_custom_call.1} parent=0
    _
  %s11 = ssub.s32 1, %s9
  %s12 = scalar_select 0, %s11, %s9
  %13 = sst [smem:[#allocation2]] %s7
  $region1: #{tpu_custom_call.1} parent=0
    #allocation3 [shape = 'u8[8192]{0}', space=vmem, size = 0x2000, scoped, tag = 'input window, operand 2, single buffered']
    #allocation4 [shape = 's32[1]{0}', space=sflag, size = 0x4, scoped, tag = 'scoped memory for tpu_custom_call.1']
    #allocation5 [shape = 's32[1]{0}', space=sflag, size = 0x4, scoped, tag = 'scoped memory for tpu_custom_call.1']
    #allocation6 [shape = 'u8[512]{0}', space=vmem, size = 0x400, scoped, tag = 'output window, operand 0, single buffered']
    %14 = vsyncpa [#allocation4], 0
    %15 = vsyncpa [#allocation5], 0
    // Predicated region
    $region2: #{tpu_custom_call.1} parent=1 // pred_check
      _
    $region3: #{tpu_custom_call.1} parent=1 // pred_check_branch
      %17 = sbr.rel (0) target = $region5
    $region4: #{tpu_custom_call.1} parent=1 // pred_region
      _
    $region5: #{tpu_custom_call.1} parent=1 // pred_fallthru
      _
    // Predicated region
    $region6: #{tpu_custom_call.1} parent=1 // pred_check
      _
    $region7: #{tpu_custom_call.1} parent=1 // pred_check_branch
      %19 = sbr.rel (0) target = $region9
    $region8: #{tpu_custom_call.1} parent=1 // pred_region
      _
    $region9: #{tpu_custom_call.1} parent=1 // pred_fallthru
      _
    // Predicated region
    $region10: #{tpu_custom_call.1} parent=1 // pred_check
      _
    $region11: #{tpu_custom_call.1} parent=1 // pred_check_branch
      %21 = sbr.rel (0) target = $region13
    $region12: #{tpu_custom_call.1} parent=1 // pred_region
      %s23 = ssub.s32 256, 256
      %24 = vsyncadd [#allocation4], %s23
      %s25 = sshll.u32 [#allocation3], 4
      %s26 = int_to_ptr.vmem [resolvable:$true] %s25
      %31 = dma.hbm_to_vmem [thread:$0]  %s2, 256, %s26, [#allocation4], 128, 128, 8
    $region13: #{tpu_custom_call.1} parent=1 // pred_fallthru
      _
    // Predicated region
    $region14: #{tpu_custom_call.1} parent=1 // pred_check
      _
    $region15: #{tpu_custom_call.1} parent=1 // pred_check_branch
      %33 = sbr.rel (0) target = $region17
    $region16: #{tpu_custom_call.1} parent=1 // pred_region
      _
    $region17: #{tpu_custom_call.1} parent=1 // pred_fallthru
      _
    // Predicated region
    $region18: #{tpu_custom_call.1} parent=1 // pred_check
      _
    $region19: #{tpu_custom_call.1} parent=1 // pred_check_branch
      %35 = sbr.rel (0) target = $region21
    $region20: #{tpu_custom_call.1} parent=1 // pred_region
      _
    $region21: #{tpu_custom_call.1} parent=1 // pred_fallthru
      _
    // Predicated region
    $region22: #{tpu_custom_call.1} parent=1 // pred_check
      _
    $region23: #{tpu_custom_call.1} parent=1 // pred_check_branch
      %37 = sbr.rel (0) target = $region25
    $region24: #{tpu_custom_call.1} parent=1 // pred_region
      _
    $region25: #{tpu_custom_call.1} parent=1 // pred_fallthru
      _
    // Predicated region
    $region26: #{tpu_custom_call.1} parent=1 // pred_check
      _
    $region27: #{tpu_custom_call.1} parent=1 // pred_check_branch
      %39 = sbr.rel (0) target = $region29
    $region28: #{tpu_custom_call.1} parent=1 // pred_region
      _
    $region29: #{tpu_custom_call.1} parent=1 // pred_fallthru
      _
    // Predicated region
    $region30: #{tpu_custom_call.1} parent=1 // pred_check
      _
    $region31: #{tpu_custom_call.1} parent=1 // pred_check_branch
      %41 = sbr.rel (0) target = $region33
    $region32: #{tpu_custom_call.1} parent=1 // pred_region
      _
    $region33: #{tpu_custom_call.1} parent=1 // pred_fallthru
      _
    // Predicated region
    $region34: #{tpu_custom_call.1} parent=1 // pred_check
      _
    $region35: #{tpu_custom_call.1} parent=1 // pred_check_branch
      %43 = sbr.rel (0) target = $region37
    $region36: #{tpu_custom_call.1} parent=1 // pred_region
      %44 = dma.done [#allocation4], 256
    $region37: #{tpu_custom_call.1} parent=1 // pred_fallthru
      _
    %v46 = vld [vmem:[%s0] sm:$0xf]
    %v47 = vld [vmem:[%s0 + $0x4] sm:$0xf]
    %v48 = vld [vmem:[%s0 + $0x8] sm:$0xf]
    %v49 = vld [vmem:[%s0 + $0xc] sm:$0xf]
    %v50 = vld [vmem:[%s0 + $0x10] sm:$0xf]
    %v51 = vld [vmem:[%s0 + $0x14] sm:$0xf]
    %v52 = vld [vmem:[%s0 + $0x18] sm:$0xf]
    %v53 = vld [vmem:[%s0 + $0x1c] sm:$0xf]
    %v54 = vld [vmem:[%s0 + $0x20] sm:$0xf]
    %v55 = vld [vmem:[%s0 + $0x24] sm:$0xf]
    %v56 = vld [vmem:[%s0 + $0x28] sm:$0xf]
    %v57 = vld [vmem:[%s0 + $0x2c] sm:$0xf]
    %v58 = vld [vmem:[%s0 + $0x30] sm:$0xf]
    %v59 = vld [vmem:[%s0 + $0x34] sm:$0xf]
    %v60 = vld [vmem:[%s0 + $0x38] sm:$0xf]
    %v61 = vld [vmem:[%s0 + $0x3c] sm:$0xf]
    %v62 = vld [vmem:[%s1] sm:$0xf]
    %v63 = vld [vmem:[%s1 + $0x4] sm:$0xf]
    %v64 = vld [vmem:[%s1 + $0x8] sm:$0xf]
    %v65 = vld [vmem:[%s1 + $0xc] sm:$0xf]
    %v66 = vld [vmem:[%s1 + $0x10] sm:$0xf]
    %v67 = vld [vmem:[%s1 + $0x14] sm:$0xf]
    %v68 = vld [vmem:[%s1 + $0x18] sm:$0xf]
    %v69 = vld [vmem:[%s1 + $0x1c] sm:$0xf]
    %v70 = vld [vmem:[%s1 + $0x20] sm:$0xf]
    %v71 = vld [vmem:[%s1 + $0x24] sm:$0xf]
    %v72 = vld [vmem:[%s1 + $0x28] sm:$0xf]
    %v73 = vld [vmem:[%s1 + $0x2c] sm:$0xf]
    %v74 = vld [vmem:[%s1 + $0x30] sm:$0xf]
    %v75 = vld [vmem:[%s1 + $0x34] sm:$0xf]
    %v76 = vld [vmem:[%s1 + $0x38] sm:$0xf]
    %v77 = vld [vmem:[%s1 + $0x3c] sm:$0xf]
    %v94 = vunpack.c.l.b16 %v46
    %v95 = vunpack.c.l.b16 %v47
    %v96 = vunpack.c.l.b16 %v48
    %v97 = vunpack.c.l.b16 %v49
    %v98 = vunpack.c.l.b16 %v50
    %v99 = vunpack.c.l.b16 %v51
    %v100 = vunpack.c.l.b16 %v52
    %v101 = vunpack.c.l.b16 %v53
    %v102 = vunpack.c.l.b16 %v54
    %v103 = vunpack.c.l.b16 %v55
    %v104 = vunpack.c.l.b16 %v56
    %v105 = vunpack.c.l.b16 %v57
    %v106 = vunpack.c.l.b16 %v58
    %v107 = vunpack.c.l.b16 %v59
    %v108 = vunpack.c.l.b16 %v60
    %v109 = vunpack.c.l.b16 %v61
    %v110 = vpack.c.b16 %v95, %v94
    %v111 = vpack.c.b16 %v97, %v96
    %v112 = vpack.c.b16 %v99, %v98
    %v113 = vpack.c.b16 %v101, %v100
    %v114 = vpack.c.b16 %v103, %v102
    %v115 = vpack.c.b16 %v105, %v104
    %v116 = vpack.c.b16 %v107, %v106
    %v117 = vpack.c.b16 %v109, %v108
    %v134 = vunpack.c.l.b16 %v62
    %v135 = vunpack.c.l.b16 %v63
    %v136 = vunpack.c.l.b16 %v64
    %v137 = vunpack.c.l.b16 %v65
    %v138 = vunpack.c.l.b16 %v66
    %v139 = vunpack.c.l.b16 %v67
    %v140 = vunpack.c.l.b16 %v68
    %v141 = vunpack.c.l.b16 %v69
    %v142 = vunpack.c.l.b16 %v70
    %v143 = vunpack.c.l.b16 %v71
    %v144 = vunpack.c.l.b16 %v72
    %v145 = vunpack.c.l.b16 %v73
    %v146 = vunpack.c.l.b16 %v74
    %v147 = vunpack.c.l.b16 %v75
    %v148 = vunpack.c.l.b16 %v76
    %v149 = vunpack.c.l.b16 %v77
    %v150 = vpack.c.b16 %v135, %v134
    %v151 = vpack.c.b16 %v137, %v136
    %v152 = vpack.c.b16 %v139, %v138
    %v153 = vpack.c.b16 %v141, %v140
    %v154 = vpack.c.b16 %v143, %v142
    %v155 = vpack.c.b16 %v145, %v144
    %v156 = vpack.c.b16 %v147, %v146
    %v157 = vpack.c.b16 %v149, %v148
    %158 = vrot.lane.b32.xlu0 %v150, 8
    %v159 = vpop.permute.xlu0 %158
    %160 = vrot.lane.b32.xlu0 %v151, 8
    %v161 = vpop.permute.xlu0 %160
    %162 = vrot.lane.b32.xlu0 %v152, 8
    %v163 = vpop.permute.xlu0 %162
    %164 = vrot.lane.b32.xlu0 %v153, 8
    %v165 = vpop.permute.xlu0 %164
    %166 = vrot.lane.b32.xlu0 %v154, 8
    %v167 = vpop.permute.xlu0 %166
    %168 = vrot.lane.b32.xlu0 %v155, 8
    %v169 = vpop.permute.xlu0 %168
    %170 = vrot.lane.b32.xlu0 %v156, 8
    %v171 = vpop.permute.xlu0 %170
    %172 = vrot.lane.b32.xlu0 %v157, 8
    %v173 = vpop.permute.xlu0 %172
    %vm174 = vcmask 64512
    %v177 = vsel %vm174, %v110, %v159
    %v180 = vsel %vm174, %v111, %v161
    %v183 = vsel %vm174, %v112, %v163
    %v186 = vsel %vm174, %v113, %v165
    %v189 = vsel %vm174, %v114, %v167
    %v192 = vsel %vm174, %v115, %v169
    %v195 = vsel %vm174, %v116, %v171
    %v198 = vsel %vm174, %v117, %v173
    %v199 = vld [vmem:[#allocation3] sm:$0xff]
    %v200 = vld [vmem:[#allocation3 + $0x8] sm:$0x33]
    %v201 = vld [vmem:[%s3] sm:$0x3]
    %v203 = vlaneseq
    %v204 = vshrl.u32 %v203, 7
    %v205 = vsub.s32 0, %v204
    %v206 = vrot.slane %v201, %v205
    %v207 = vlaneseq
    %v208 = vshrl.u32 %v207, 7
    %v209 = vsub.s32 1, %v208
    %v210 = vrot.slane %v201, %v209
    %v215 = vunpack.c.l.b16 %v199
    %v216 = vunpack.c.h.b16 %v199
    %v217 = vunpack.c.l.b16 %v200
    %v218 = vunpack.c.h.b16 %v200
    %v219 = vpack.c.b16 %v217, %v215
    %v220 = vpack.c.b16 %v218, %v216
    %vm221 = vcmask 97280
    %v222 = vsel %vm221, %v177, 0
    %v224 = vsel %vm221, %v180, 0
    %v226 = vsel %vm221, %v183, 0
    %v228 = vsel %vm221, %v186, 0
    %v230 = vsel %vm221, %v189, 0
    %v232 = vsel %vm221, %v192, 0
    %v234 = vsel %vm221, %v195, 0
    %v236 = vsel %vm221, %v198, 0
    %vm238 = vcmask 1045504
    %v240 = vsel %vm238, %v219, 0
    %v243 = vsel %vm238, %v220, 0
    %245 = vmatprep.subr.bf16.mxu0 0
    %246 = vmatpush1.bf16.msra.mxu0 0
    %247 = vmatprep.subr.bf16.mxu0 0
    %248 = vmatpush1.bf16.msra.mxu0 0
    %249 = vmatprep.subr.bf16.mxu0 0
    %250 = vmatpush1.bf16.msra.mxu0 0
    %251 = vmatprep.subr.bf16.mxu0 0
    %252 = vmatpush1.bf16.msra.mxu0 0
    %253 = vmatprep.subr.bf16.mxu0 0
    %254 = vmatpush1.bf16.msra.mxu0 0
    %255 = vmatprep.subr.bf16.mxu0 0
    %256 = vmatpush1.bf16.msra.mxu0 0
    %257 = vmatprep.subr.bf16.mxu0 0
    %258 = vmatpush1.bf16.msra.mxu0 0
    %259 = vmatprep.subr.bf16.mxu0 %v243
    %260 = vmatpush1.bf16.msra.mxu0 %v240
    %261 = vmatprep.subr.bf16.mxu0 0
    %262 = vmatpush2.bf16.msra.mxu0 0
    %263 = vmatprep.subr.bf16.mxu0 0
    %264 = vmatpush2.bf16.msra.mxu0 0
    %265 = vmatprep.subr.bf16.mxu0 0
    %266 = vmatpush2.bf16.msra.mxu0 0
    %267 = vmatprep.subr.bf16.mxu0 0
    %268 = vmatpush2.bf16.msra.mxu0 0
    %269 = vmatprep.subr.bf16.mxu0 0
    %270 = vmatpush2.bf16.msra.mxu0 0
    %271 = vmatprep.subr.bf16.mxu0 0
    %272 = vmatpush2.bf16.msra.mxu0 0
    %273 = vmatprep.subr.bf16.mxu0 0
    %274 = vmatpush2.bf16.msra.mxu0 0
    %275 = vmatprep.subr.bf16.mxu0 0
    %276 = vmatpush2.bf16.msra.mxu0 0
    %277 = vmatprep.mubr.bf16.mxu0 0
    %278 = vmatmul.mubr.bf16.gmra.mxu0 %v222
    %v279 = vpop.f32.mrf.mxu0
    %v280 = vadd.f32 %v206, %v279
    %v281 = vpop.f32.mrf.mxu0
    %v282 = vadd.f32 %v210, %v281
    %v283 = vpop.f32.mrf.mxu0
    %v284 = vadd.f32 %v206, %v283
    %v285 = vpop.f32.mrf.mxu0
    %v286 = vadd.f32 %v210, %v285
    %287 = vmatprep.mubr.bf16.mxu0 0
    %288 = vmatmul.mubr.bf16.gmra.mxu0 %v224
    %v289 = vpop.f32.mrf.mxu0
    %v290 = vadd.f32 %v206, %v289
    %v291 = vpop.f32.mrf.mxu0
    %v292 = vadd.f32 %v210, %v291
    %v293 = vpop.f32.mrf.mxu0
    %v294 = vadd.f32 %v206, %v293
    %v295 = vpop.f32.mrf.mxu0
    %v296 = vadd.f32 %v210, %v295
    %297 = vmatprep.mubr.bf16.mxu0 0
    %298 = vmatmul.mubr.bf16.gmra.mxu0 %v226
    %v299 = vpop.f32.mrf.mxu0
    %v300 = vadd.f32 %v206, %v299
    %v301 = vpop.f32.mrf.mxu0
    %v302 = vadd.f32 %v210, %v301
    %v303 = vpop.f32.mrf.mxu0
    %v304 = vadd.f32 %v206, %v303
    %v305 = vpop.f32.mrf.mxu0
    %v306 = vadd.f32 %v210, %v305
    %307 = vmatprep.mubr.bf16.mxu0 0
    %308 = vmatmul.mubr.bf16.gmra.mxu0 %v228
    %v309 = vpop.f32.mrf.mxu0
    %v310 = vadd.f32 %v206, %v309
    %v311 = vpop.f32.mrf.mxu0
    %v312 = vadd.f32 %v210, %v311
    %v313 = vpop.f32.mrf.mxu0
    %v314 = vadd.f32 %v206, %v313
    %v315 = vpop.f32.mrf.mxu0
    %v316 = vadd.f32 %v210, %v315
    %317 = vmatprep.mubr.bf16.mxu0 0
    %318 = vmatmul.mubr.bf16.gmra.mxu0 %v230
    %v319 = vpop.f32.mrf.mxu0
    %v320 = vadd.f32 %v206, %v319
    %v321 = vpop.f32.mrf.mxu0
    %v322 = vadd.f32 %v210, %v321
    %v323 = vpop.f32.mrf.mxu0
    %v324 = vadd.f32 %v206, %v323
    %v325 = vpop.f32.mrf.mxu0
    %v326 = vadd.f32 %v210, %v325
    %327 = vmatprep.mubr.bf16.mxu0 0
    %328 = vmatmul.mubr.bf16.gmra.mxu0 %v232
    %v329 = vpop.f32.mrf.mxu0
    %v330 = vadd.f32 %v206, %v329
    %v331 = vpop.f32.mrf.mxu0
    %v332 = vadd.f32 %v210, %v331
    %v333 = vpop.f32.mrf.mxu0
    %v334 = vadd.f32 %v206, %v333
    %v335 = vpop.f32.mrf.mxu0
    %v336 = vadd.f32 %v210, %v335
    %337 = vmatprep.mubr.bf16.mxu0 0
    %338 = vmatmul.mubr.bf16.gmra.mxu0 %v234
    %v339 = vpop.f32.mrf.mxu0
    %v340 = vadd.f32 %v206, %v339
    %v341 = vpop.f32.mrf.mxu0
    %v342 = vadd.f32 %v210, %v341
    %v343 = vpop.f32.mrf.mxu0
    %v344 = vadd.f32 %v206, %v343
    %v345 = vpop.f32.mrf.mxu0
    %v346 = vadd.f32 %v210, %v345
    %347 = vmatprep.mubr.bf16.mxu0 0
    %348 = vmatmul.mubr.bf16.gmra.mxu0 %v236
    %v349 = vpop.f32.mrf.mxu0
    %v350 = vadd.f32 %v206, %v349
    %v351 = vpop.f32.mrf.mxu0
    %v352 = vadd.f32 %v210, %v351
    %v353 = vpop.f32.mrf.mxu0
    %v354 = vadd.f32 %v206, %v353
    %v355 = vpop.f32.mrf.mxu0
    %v356 = vadd.f32 %v210, %v355
    %357 = vdwg.mxu0
    %v358 = vmax.f32 %v280, 0.0
    %v359 = vmax.f32 %v282, 0.0
    %v360 = vmax.f32 %v284, 0.0
    %v361 = vmax.f32 %v286, 0.0
    %v362 = vmax.f32 %v290, 0.0
    %v363 = vmax.f32 %v292, 0.0
    %v364 = vmax.f32 %v294, 0.0
    %v365 = vmax.f32 %v296, 0.0
    %v366 = vmax.f32 %v300, 0.0
    %v367 = vmax.f32 %v302, 0.0
    %v368 = vmax.f32 %v304, 0.0
    %v369 = vmax.f32 %v306, 0.0
    %v370 = vmax.f32 %v310, 0.0
    %v371 = vmax.f32 %v312, 0.0
    %v372 = vmax.f32 %v314, 0.0
    %v373 = vmax.f32 %v316, 0.0
    %v374 = vmax.f32 %v320, 0.0
    %v375 = vmax.f32 %v322, 0.0
    %v376 = vmax.f32 %v324, 0.0
    %v377 = vmax.f32 %v326, 0.0
    %v378 = vmax.f32 %v330, 0.0
    %v379 = vmax.f32 %v332, 0.0
    %v380 = vmax.f32 %v334, 0.0
    %v381 = vmax.f32 %v336, 0.0
    %v382 = vmax.f32 %v340, 0.0
    %v383 = vmax.f32 %v342, 0.0
    %v384 = vmax.f32 %v344, 0.0
    %v385 = vmax.f32 %v346, 0.0
    %v386 = vmax.f32 %v350, 0.0
    %v387 = vmax.f32 %v352, 0.0
    %v388 = vmax.f32 %v354, 0.0
    %v389 = vmax.f32 %v356, 0.0
    %v390 = vpack.c.bf16 %v360, %v358
    %v391 = vpack.c.bf16 %v361, %v359
    %v392 = vpack.c.bf16 %v364, %v362
    %v393 = vpack.c.bf16 %v365, %v363
    %v394 = vpack.c.bf16 %v368, %v366
    %v395 = vpack.c.bf16 %v369, %v367
    %v396 = vpack.c.bf16 %v372, %v370
    %v397 = vpack.c.bf16 %v373, %v371
    %v398 = vpack.c.bf16 %v376, %v374
    %v399 = vpack.c.bf16 %v377, %v375
    %v400 = vpack.c.bf16 %v380, %v378
    %v401 = vpack.c.bf16 %v381, %v379
    %v402 = vpack.c.bf16 %v384, %v382
    %v403 = vpack.c.bf16 %v385, %v383
    %v404 = vpack.c.bf16 %v388, %v386
    %v405 = vpack.c.bf16 %v389, %v387
    %v406 = vld [vmem:[%s4] sm:$0xf]
    %v407 = vld [vmem:[%s4 + $0x4] sm:$0xf]
    %v408 = vld [vmem:[%s4 + $0x8] sm:$0xf]
    %v409 = vld [vmem:[%s4 + $0xc] sm:$0xf]
    %v410 = vld [vmem:[%s4 + $0x10] sm:$0xf]
    %v411 = vld [vmem:[%s4 + $0x14] sm:$0xf]
    %v412 = vld [vmem:[%s4 + $0x18] sm:$0xf]
    %v413 = vld [vmem:[%s4 + $0x1c] sm:$0xf]
    %v414 = vld [vmem:[%s4 + $0x20] sm:$0xf]
    %v415 = vld [vmem:[%s4 + $0x24] sm:$0xf]
    %v416 = vld [vmem:[%s4 + $0x28] sm:$0xf]
    %v417 = vld [vmem:[%s4 + $0x2c] sm:$0xf]
    %v418 = vld [vmem:[%s4 + $0x30] sm:$0xf]
    %v419 = vld [vmem:[%s4 + $0x34] sm:$0xf]
    %v420 = vld [vmem:[%s4 + $0x38] sm:$0xf]
    %v421 = vld [vmem:[%s4 + $0x3c] sm:$0xf]
    %v422 = vld [vmem:[%s4 + $0x40] sm:$0xf]
    %v423 = vld [vmem:[%s4 + $0x44] sm:$0xf]
    %v424 = vld [vmem:[%s4 + $0x48] sm:$0xf]
    %v425 = vld [vmem:[%s4 + $0x4c] sm:$0xf]
    %v426 = vld [vmem:[%s4 + $0x50] sm:$0xf]
    %v427 = vld [vmem:[%s4 + $0x54] sm:$0xf]
    %v428 = vld [vmem:[%s4 + $0x58] sm:$0xf]
    %v429 = vld [vmem:[%s4 + $0x5c] sm:$0xf]
    %v430 = vld [vmem:[%s4 + $0x60] sm:$0xf]
    %v431 = vld [vmem:[%s4 + $0x64] sm:$0xf]
    %v432 = vld [vmem:[%s4 + $0x68] sm:$0xf]
    %v433 = vld [vmem:[%s4 + $0x6c] sm:$0xf]
    %v434 = vld [vmem:[%s4 + $0x70] sm:$0xf]
    %v435 = vld [vmem:[%s4 + $0x74] sm:$0xf]
    %v436 = vld [vmem:[%s4 + $0x78] sm:$0xf]
    %v437 = vld [vmem:[%s4 + $0x7c] sm:$0xf]
    %v438 = vld [vmem:[%s5] sm:$0x1]
    %v440 = vlaneseq
    %v441 = vshrl.u32 %v440, 7
    %v442 = vsub.s32 0, %v441
    %v443 = vrot.slane %v438, %v442
    %v477 = vunpack.c.l.b16 %v406
    %v478 = vunpack.c.l.b16 %v407
    %v479 = vunpack.c.l.b16 %v408
    %v480 = vunpack.c.l.b16 %v409
    %v481 = vunpack.c.l.b16 %v410
    %v482 = vunpack.c.l.b16 %v411
    %v483 = vunpack.c.l.b16 %v412
    %v484 = vunpack.c.l.b16 %v413
    %v485 = vunpack.c.l.b16 %v414
    %v486 = vunpack.c.l.b16 %v415
    %v487 = vunpack.c.l.b16 %v416
    %v488 = vunpack.c.l.b16 %v417
    %v489 = vunpack.c.l.b16 %v418
    %v490 = vunpack.c.l.b16 %v419
    %v491 = vunpack.c.l.b16 %v420
    %v492 = vunpack.c.l.b16 %v421
    %v493 = vunpack.c.l.b16 %v422
    %v494 = vunpack.c.l.b16 %v423
    %v495 = vunpack.c.l.b16 %v424
    %v496 = vunpack.c.l.b16 %v425
    %v497 = vunpack.c.l.b16 %v426
    %v498 = vunpack.c.l.b16 %v427
    %v499 = vunpack.c.l.b16 %v428
    %v500 = vunpack.c.l.b16 %v429
    %v501 = vunpack.c.l.b16 %v430
    %v502 = vunpack.c.l.b16 %v431
    %v503 = vunpack.c.l.b16 %v432
    %v504 = vunpack.c.l.b16 %v433
    %v505 = vunpack.c.l.b16 %v434
    %v506 = vunpack.c.l.b16 %v435
    %v507 = vunpack.c.l.b16 %v436
    %v508 = vunpack.c.l.b16 %v437
    %v509 = vpack.c.b16 %v478, %v477
    %v510 = vpack.c.b16 %v480, %v479
    %v511 = vpack.c.b16 %v482, %v481
    %v512 = vpack.c.b16 %v484, %v483
    %v513 = vpack.c.b16 %v486, %v485
    %v514 = vpack.c.b16 %v488, %v487
    %v515 = vpack.c.b16 %v490, %v489
    %v516 = vpack.c.b16 %v492, %v491
    %v517 = vpack.c.b16 %v494, %v493
    %v518 = vpack.c.b16 %v496, %v495
    %v519 = vpack.c.b16 %v498, %v497
    %v520 = vpack.c.b16 %v500, %v499
    %v521 = vpack.c.b16 %v502, %v501
    %v522 = vpack.c.b16 %v504, %v503
    %v523 = vpack.c.b16 %v506, %v505
    %v524 = vpack.c.b16 %v508, %v507
    %541 = vmatprep.subr.bf16.mxu0 0
    %542 = vmatpush1.bf16.msra.mxu0 %v516
    %543 = vmatprep.subr.bf16.mxu0 0
    %544 = vmatpush1.bf16.msra.mxu0 %v515
    %545 = vmatprep.subr.bf16.mxu0 0
    %546 = vmatpush1.bf16.msra.mxu0 %v514
    %547 = vmatprep.subr.bf16.mxu0 0
    %548 = vmatpush1.bf16.msra.mxu0 %v513
    %549 = vmatprep.subr.bf16.mxu0 0
    %550 = vmatpush1.bf16.msra.mxu0 %v512
    %551 = vmatprep.subr.bf16.mxu0 0
    %552 = vmatpush1.bf16.msra.mxu0 %v511
    %553 = vmatprep.subr.bf16.mxu0 0
    %554 = vmatpush1.bf16.msra.mxu0 %v510
    %555 = vmatprep.subr.bf16.mxu0 0
    %556 = vmatpush1.bf16.msra.mxu0 %v509
    %557 = vmatprep.subr.bf16.mxu0 0
    %558 = vmatpush2.bf16.msra.mxu0 %v524
    %559 = vmatprep.subr.bf16.mxu0 0
    %560 = vmatpush2.bf16.msra.mxu0 %v523
    %561 = vmatprep.subr.bf16.mxu0 0
    %562 = vmatpush2.bf16.msra.mxu0 %v522
    %563 = vmatprep.subr.bf16.mxu0 0
    %564 = vmatpush2.bf16.msra.mxu0 %v521
    %565 = vmatprep.subr.bf16.mxu0 0
    %566 = vmatpush2.bf16.msra.mxu0 %v520
    %567 = vmatprep.subr.bf16.mxu0 0
    %568 = vmatpush2.bf16.msra.mxu0 %v519
    %569 = vmatprep.subr.bf16.mxu0 0
    %570 = vmatpush2.bf16.msra.mxu0 %v518
    %571 = vmatprep.subr.bf16.mxu0 0
    %572 = vmatpush2.bf16.msra.mxu0 %v517
    %573 = vmatprep.mubr.bf16.mxu0 %v391
    %574 = vmatmul.mubr.bf16.gmra.mxu0 %v390
    %v575 = vpop.f32.mrf.mxu0
    %v576 = vadd.f32 %v443, %v575
    %v577 = vpop.f32.mrf.mxu0
    %v578 = vpop.f32.mrf.mxu0
    %v579 = vadd.f32 %v443, %v578
    %v580 = vpop.f32.mrf.mxu0
    %581 = vmatprep.mubr.bf16.mxu0 %v393
    %582 = vmatmul.mubr.bf16.gmra.mxu0 %v392
    %v583 = vpop.f32.mrf.mxu0
    %v584 = vadd.f32 %v443, %v583
    %v585 = vpop.f32.mrf.mxu0
    %v586 = vpop.f32.mrf.mxu0
    %v587 = vadd.f32 %v443, %v586
    %v588 = vpop.f32.mrf.mxu0
    %589 = vmatprep.mubr.bf16.mxu0 %v395
    %590 = vmatmul.mubr.bf16.gmra.mxu0 %v394
    %v591 = vpop.f32.mrf.mxu0
    %v592 = vadd.f32 %v443, %v591
    %v593 = vpop.f32.mrf.mxu0
    %v594 = vpop.f32.mrf.mxu0
    %v595 = vadd.f32 %v443, %v594
    %v596 = vpop.f32.mrf.mxu0
    %597 = vmatprep.mubr.bf16.mxu0 %v397
    %598 = vmatmul.mubr.bf16.gmra.mxu0 %v396
    %v599 = vpop.f32.mrf.mxu0
    %v600 = vadd.f32 %v443, %v599
    %v601 = vpop.f32.mrf.mxu0
    %v602 = vpop.f32.mrf.mxu0
    %v603 = vadd.f32 %v443, %v602
    %v604 = vpop.f32.mrf.mxu0
    %605 = vmatprep.mubr.bf16.mxu0 %v399
    %606 = vmatmul.mubr.bf16.gmra.mxu0 %v398
    %v607 = vpop.f32.mrf.mxu0
    %v608 = vadd.f32 %v443, %v607
    %v609 = vpop.f32.mrf.mxu0
    %v610 = vpop.f32.mrf.mxu0
    %v611 = vadd.f32 %v443, %v610
    %v612 = vpop.f32.mrf.mxu0
    %613 = vmatprep.mubr.bf16.mxu0 %v401
    %614 = vmatmul.mubr.bf16.gmra.mxu0 %v400
    %v615 = vpop.f32.mrf.mxu0
    %v616 = vadd.f32 %v443, %v615
    %v617 = vpop.f32.mrf.mxu0
    %v618 = vpop.f32.mrf.mxu0
    %v619 = vadd.f32 %v443, %v618
    %v620 = vpop.f32.mrf.mxu0
    %621 = vmatprep.mubr.bf16.mxu0 %v403
    %622 = vmatmul.mubr.bf16.gmra.mxu0 %v402
    %v623 = vpop.f32.mrf.mxu0
    %v624 = vadd.f32 %v443, %v623
    %v625 = vpop.f32.mrf.mxu0
    %v626 = vpop.f32.mrf.mxu0
    %v627 = vadd.f32 %v443, %v626
    %v628 = vpop.f32.mrf.mxu0
    %629 = vmatprep.mubr.bf16.mxu0 %v405
    %630 = vmatmul.mubr.bf16.gmra.mxu0 %v404
    %v631 = vpop.f32.mrf.mxu0
    %v632 = vadd.f32 %v443, %v631
    %v633 = vpop.f32.mrf.mxu0
    %v634 = vpop.f32.mrf.mxu0
    %v635 = vadd.f32 %v443, %v634
    %v636 = vpop.f32.mrf.mxu0
    %637 = vdwg.mxu0
    %v638 = vmax.f32 %v576, 0.0
    %v639 = vmax.f32 %v579, 0.0
    %v640 = vmax.f32 %v584, 0.0
    %v641 = vmax.f32 %v587, 0.0
    %v642 = vmax.f32 %v592, 0.0
    %v643 = vmax.f32 %v595, 0.0
    %v644 = vmax.f32 %v600, 0.0
    %v645 = vmax.f32 %v603, 0.0
    %v646 = vmax.f32 %v608, 0.0
    %v647 = vmax.f32 %v611, 0.0
    %v648 = vmax.f32 %v616, 0.0
    %v649 = vmax.f32 %v619, 0.0
    %v650 = vmax.f32 %v624, 0.0
    %v651 = vmax.f32 %v627, 0.0
    %v652 = vmax.f32 %v632, 0.0
    %v653 = vmax.f32 %v635, 0.0
    %v654 = vld [vmem:[%s6] sm:$0x1]
    %v655 = vpack.c.bf16 %v639, %v638
    %v656 = vpack.c.bf16 %v641, %v640
    %v657 = vpack.c.bf16 %v643, %v642
    %v658 = vpack.c.bf16 %v645, %v644
    %v659 = vpack.c.bf16 %v647, %v646
    %v660 = vpack.c.bf16 %v649, %v648
    %v661 = vpack.c.bf16 %v651, %v650
    %v662 = vpack.c.bf16 %v653, %v652
    %s663 = sld [smem:[#allocation2]]
    %v664 = vstv %s663
    %665 = vmatprep.subr.bf16.mxu0 0
    %666 = vmatpush1.bf16.xpose.msra.mxu0 %v662
    %667 = vmatprep.subr.bf16.mxu0 0
    %668 = vmatpush1.bf16.xpose.msra.mxu0 %v661
    %669 = vmatprep.subr.bf16.mxu0 0
    %670 = vmatpush1.bf16.xpose.msra.mxu0 %v660
    %671 = vmatprep.subr.bf16.mxu0 0
    %672 = vmatpush1.bf16.xpose.msra.mxu0 %v659
    %673 = vmatprep.subr.bf16.mxu0 0
    %674 = vmatpush1.bf16.xpose.msra.mxu0 %v658
    %675 = vmatprep.subr.bf16.mxu0 0
    %676 = vmatpush1.bf16.xpose.msra.mxu0 %v657
    %677 = vmatprep.subr.bf16.mxu0 0
    %678 = vmatpush1.bf16.xpose.msra.mxu0 %v656
    %679 = vmatprep.subr.bf16.mxu0 0
    %680 = vmatpush1.bf16.xpose.msra.mxu0 %v655
    %681 = vmatprep.subr.bf16.mxu0 0
    %682 = vmatpush2.bf16.xpose.msra.mxu0 0
    %683 = vmatprep.subr.bf16.mxu0 0
    %684 = vmatpush2.bf16.xpose.msra.mxu0 0
    %685 = vmatprep.subr.bf16.mxu0 0
    %686 = vmatpush2.bf16.xpose.msra.mxu0 0
    %687 = vmatprep.subr.bf16.mxu0 0
    %688 = vmatpush2.bf16.xpose.msra.mxu0 0
    %689 = vmatprep.subr.bf16.mxu0 0
    %690 = vmatpush2.bf16.xpose.msra.mxu0 0
    %691 = vmatprep.subr.bf16.mxu0 0
    %692 = vmatpush2.bf16.xpose.msra.mxu0 0
    %693 = vmatprep.subr.bf16.mxu0 0
    %694 = vmatpush2.bf16.xpose.msra.mxu0 0
    %695 = vmatprep.subr.bf16.mxu0 0
    %696 = vmatpush2.bf16.xpose.msra.mxu0 0
    %697 = vmatprep.mubr.bf16.mxu0 0
    %698 = vmatmul.mubr.bf16.gmra.mxu0 %v654
    %v699 = vpop.f32.mrf.mxu0
    %v700 = vadd.f32 %v664, %v699
    %v701 = vpop.f32.mrf.mxu0
    %v702 = vpop.f32.mrf.mxu0
    %v703 = vpop.f32.mrf.mxu0
    %704 = vdwg.mxu0
    %705 = vst [vmem:[#allocation6] sm:$0x1] %v700
    // Predicated region
    $region38: #{tpu_custom_call.1} parent=1 // pred_check
      _
    $region39: #{tpu_custom_call.1} parent=1 // pred_check_branch
      %707 = sbr.rel (0) target = $region41
    $region40: #{tpu_custom_call.1} parent=1 // pred_region
      %s709 = ssub.s32 16, 16
      %710 = vsyncadd [#allocation5], %s709
      %s712 = sshll.u32 [#allocation6], 4
      %s713 = int_to_ptr.vmem [resolvable:$true] %s712
      %715 = dma.vmem_to_hbm [thread:$0]  %s713, 16, %s8, [#allocation5]
    $region41: #{tpu_custom_call.1} parent=1 // pred_fallthru
      _
    // Predicated region
    $region42: #{tpu_custom_call.1} parent=1 // pred_check
      _
    $region43: #{tpu_custom_call.1} parent=1 // pred_check_branch
      %717 = sbr.rel (0) target = $region45
    $region44: #{tpu_custom_call.1} parent=1 // pred_region
      %718 = dma.done [#allocation5], 16
    $region45: #{tpu_custom_call.1} parent=1 // pred_fallthru
      _
    %719 = vsyncpa [#allocation4], 1
    %720 = vsyncpa [#allocation5], 1

</llo_original>
